<compile_context>
chip_gen: v7x
topology: tpu7x:2x2x1
jax: 0.10.0
libtpu: 0.0.40
codegen_flags: <defaults>
</compile_context>

<pallas_src>
import functools

import numpy as np

import jax
import jax.numpy as jnp
from jax.experimental import pallas as pl
from jax.experimental.pallas import tpu as pltpu


def _triple2vec_kernel(packed_ref, neg_ref, expand_ref, sel_ref, out_ref,
                       *, total_b, block_b, n_neg, emb_dim):
    pid = pl.program_id(0)
    D = emb_dim
    N = n_neg

    # Per-row validity mask for the zero-padded tail of the batch.
    row = pid * block_b + jax.lax.broadcasted_iota(jnp.int32, (block_b, 1), 0)
    valid = (row < total_b).astype(jnp.float32)                   # (TB, 1)

    packed = packed_ref[...]                                      # (TB, P)
    negs = neg_ref[...]                                           # (TB, 3*N*D)
    expand = expand_ref[...]                                      # (3*D, 3*N*D)
    sel = sel_ref[...]                                            # (3*N*D, 3*N)

    # Static lane slices of the packed input.
    emb_u = packed[:, 0:D]                                        # (TB, D)
    emb_i1 = packed[:, D:2 * D]                                   # (TB, D)
    emb_i2 = packed[:, 2 * D:3 * D]                               # (TB, D)
    anchor_cat = packed[:, 0:3 * D]                               # (TB, 3*D)
    pos_b = packed[:, 3 * D:3 * D + 3]                            # (TB, 3)
    neg_b = packed[:, 3 * D + 3:3 * D + 3 + 3 * N]                # (TB, 3*N)

    def logsig(x):
        # Stable log(sigmoid(x)): one exp + one log1p (both on the EUP).
        return jnp.minimum(x, 0.0) - jnp.log1p(jnp.exp(-jnp.abs(x)))

    # ----- positive scores: the three terms share pairwise dot products -----
    #   term_u  = u.i1 + u.i2 ; term_i1 = u.i1 + i1.i2 ; term_i2 = u.i2 + i1.i2
    a = jnp.sum(emb_u * emb_i1, axis=1, keepdims=True)            # (TB, 1)
    b = jnp.sum(emb_u * emb_i2, axis=1, keepdims=True)
    c = jnp.sum(emb_i1 * emb_i2, axis=1, keepdims=True)
    pos_s = jnp.concatenate([a + b, a + c, b + c], axis=1) + pos_b  # (TB, 3)

    # ----- negative scores: two MXU matmuls (anchor replication + selector) --
    # anchor_rep[b, g*N*D + n*D + d] = anchor_g[b, d]   (g in {u, i1, i2})
    anchor_rep = jnp.dot(anchor_cat, expand,
                         preferred_element_type=jnp.float32)      # (TB, 3*N*D)
    prod = negs * anchor_rep                                      # (TB, 3*N*D)
    neg_s = jnp.dot(prod, sel,
                    preferred_element_type=jnp.float32) + neg_b   # (TB, 3*N)

    # ----- fused reductions: per-row sums, one mask multiply, one reduce -----
    row_sum = (jnp.sum(logsig(pos_s), axis=1, keepdims=True)
               + jnp.sum(logsig(-neg_s), axis=1, keepdims=True))  # (TB, 1)
    total = jnp.sum(row_sum * valid)

    # One-hot write of the per-tile partial into a lane-dense (1, 8, 128)
    # output block (unmasked full-tile store; summed in the JAX epilogue).
    sub = jax.lax.broadcasted_iota(jnp.int32, (1, 8, 128), 1)
    lane = jax.lax.broadcasted_iota(jnp.int32, (1, 8, 128), 2)
    out_ref[...] = jnp.where((sub == 0) & (lane == 0), total, 0.0).astype(
        jnp.float32)


def _round_up(x, m):
    return ((x + m - 1) // m) * m


def triple2vec_forward(params, pos_u, pos_i_1, pos_i_2, neg_u, neg_i_1, neg_i_2,
                       batch_size, *, block_b=None, interpret=False):
    """Reproduces Triple2vec.forward. Returns a scalar float32."""
    B = int(pos_u.shape[0])
    N = int(neg_u.shape[1])
    D = int(params["user_emb"].shape[1])
    D3 = 3 * D
    ND3 = 3 * N * D

    # ----- glue: embedding gathers (data-dependent row selection) -----------
    # TODO(synk): on v5e/v6e (128 MiB VMEM) the tables could be kept
    # VMEM-resident and the negative gathers done in-kernel with
    # scalar-prefetched indices, removing the XLA gather's extra HBM pass;
    # kept in JAX here for portability to v7x's 64 MiB VMEM.
    emb_u = params["user_emb"][pos_u]                        # (B, D)
    emb_i_1 = params["item_emb"][pos_i_1]                    # (B, D)
    emb_i_2 = params["item_emb2"][pos_i_2]                   # (B, D)

    # NOTE: original PyTorch indexes item_emb with neg_i_2 (not neg_i_1) while
    # using item_bias(neg_i_1) for that term's bias; reproduced exactly.
    neg_all = jnp.concatenate(
        [params["user_emb"][neg_u],
         params["item_emb"][neg_i_2],
         params["item_emb2"][neg_i_2]], axis=1).reshape(B, ND3)   # (B, 3*N*D)

    pos_bias = jnp.concatenate(
        [params["user_bias"][pos_u],
         params["item_bias"][pos_i_1],
         params["item_bias"][pos_i_2]], axis=1)              # (B, 3)
    neg_bias = jnp.concatenate(
        [params["user_bias"][neg_u][..., 0],
         params["item_bias"][neg_i_1][..., 0],
         params["item_bias"][neg_i_2][..., 0]], axis=1)      # (B, 3*N)

    # One lane-dense packed array for everything except the negatives.
    P = _round_up(D3 + 3 + 3 * N, 128)
    packed = jnp.concatenate([emb_u, emb_i_1, emb_i_2, pos_bias, neg_bias],
                             axis=1)                          # (B, 3D+3+3N)
    packed = jnp.pad(packed, ((0, 0), (0, P - packed.shape[1])))

    # Loop-invariant selector matrices (built once, DMA'd once).
    k = np.arange(D3)[:, None]
    m = np.arange(ND3)[None, :]
    expand_np = ((m // (N * D) == k // D) & (m % D == k % D)).astype(np.float32)
    sel_np = (np.arange(ND3)[:, None] // D
              == np.arange(3 * N)[None, :]).astype(np.float32)
    expand = jnp.asarray(expand_np)                           # (3*D, 3*N*D)
    sel = jnp.asarray(sel_np)                                 # (3*N*D, 3*N)

    # ----- generation-aware tile sizing & VMEM budget ------------------------
    try:
        vmem_cap = int(pltpu.get_tpu_info().vmem_capacity_bytes)
    except Exception:
        vmem_cap = 64 << 20                                   # conservative (v7x)
    vmem_limit = max(16 << 20, min(int(0.75 * vmem_cap), 96 << 20))

    ND3_pad = _round_up(ND3, 128)
    # Double-buffered inputs + in-kernel intermediates (anchor_rep, prod,
    # logsig temps ~ 4x the negative tile).
    bytes_per_row = 4 * (2 * (ND3_pad + P) + 4 * ND3_pad)
    const_bytes = 4 * 2 * (_round_up(D3, 8) * ND3_pad
                           + ND3_pad * _round_up(3 * N, 128))

    if block_b is None:
        avail = vmem_limit - const_bytes - (2 << 20)
        tb = max(8, min(4096, avail // bytes_per_row))
        tb = max(8, (tb // 8) * 8)
    else:
        tb = _round_up(int(block_b), 8)
    tb = min(tb, _round_up(B, 8))

    B_pad = _round_up(B, tb)
    num_tiles = B_pad // tb

    def pad_b(x):
        if B_pad == B:
            return x
        return jnp.pad(x, [(0, B_pad - B), (0, 0)])

    packed = pad_b(packed)
    neg_all = pad_b(neg_all)

    in_specs = [
        pl.BlockSpec((tb, P), lambda i: (i, 0)),
        pl.BlockSpec((tb, ND3), lambda i: (i, 0)),
        pl.BlockSpec((D3, ND3), lambda i: (0, 0)),     # constant: DMA'd once
        pl.BlockSpec((ND3, 3 * N), lambda i: (0, 0)),  # constant: DMA'd once
    ]
    out_spec = pl.BlockSpec((1, 8, 128), lambda i: (i, 0, 0))

    kernel = functools.partial(_triple2vec_kernel,
                               total_b=B, block_b=tb, n_neg=N, emb_dim=D)

    partials = pl.pallas_call(
        kernel,
        grid=(num_tiles,),
        in_specs=in_specs,
        out_specs=out_spec,
        out_shape=jax.ShapeDtypeStruct((num_tiles, 8, 128), jnp.float32),
        compiler_params=pltpu.CompilerParams(
            dimension_semantics=("parallel",),
            vmem_limit_bytes=int(vmem_limit)),
        interpret=interpret,
    )(packed, neg_all, expand, sel)

    return -jnp.sum(partials) / (3.0 * float(batch_size))


def _reference_forward(params, pos_u, pos_i_1, pos_i_2, neg_u, neg_i_1, neg_i_2,
                       batch_size):
    """Pure-JAX reference mirroring the PyTorch forward."""
    emb_u = params["user_emb"][pos_u]
    emb_i_1 = params["item_emb"][pos_i_1]
    emb_i_2 = params["item_emb2"][pos_i_2]
    emb_u_neg = params["user_emb"][neg_u]
    emb_i_1_neg = params["item_emb"][neg_i_2]
    emb_i_2_neg = params["item_emb2"][neg_i_2]

    logsig = jax.nn.log_sigmoid

    def score(anchor, ctx_sum, pos_bias, neg_emb, neg_bias):
        ps = jnp.sum(anchor * ctx_sum, axis=1) + pos_bias
        ps = logsig(ps)
        ns = jnp.einsum("bnd,bd->bn", neg_emb, anchor) + neg_bias
        ns = logsig(-ns)
        return -(jnp.sum(ps) + jnp.sum(ns))

    u_score = score(emb_u, emb_i_1 + emb_i_2,
                    params["user_bias"][pos_u][:, 0],
                    emb_u_neg, params["user_bias"][neg_u][..., 0])
    i1_score = score(emb_i_1, emb_u + emb_i_2,
                     params["item_bias"][pos_i_1][:, 0],
                     emb_i_1_neg, params["item_bias"][neg_i_1][..., 0])
    i2_score = score(emb_i_2, emb_u + emb_i_1,
                     params["item_bias"][pos_i_2][:, 0],
                     emb_i_2_neg, params["item_bias"][neg_i_2][..., 0])
    return (u_score + i1_score + i2_score) / (3.0 * batch_size)


def init_params(key, n_users, n_items, emb_dim):
    k1, k2, k3 = jax.random.split(key, 3)
    unif = lambda k, shape: jax.random.uniform(k, shape, jnp.float32, -0.01, 0.01)
    return {
        "user_emb": unif(k1, (n_users, emb_dim)),
        "item_emb": unif(k2, (n_items, emb_dim)),
        "item_emb2": unif(k3, (n_items, emb_dim)),
        "user_bias": jnp.zeros((n_users, 1), jnp.float32),
        "item_bias": jnp.zeros((n_items, 1), jnp.float32),
    }


if __name__ == "__main__":
    n_users, n_items, emb_dim, n_neg, batch_size = 32, 48, 32, 4, 8

    key = jax.random.PRNGKey(0)
    kp, ku, ki1, ki2, knu, kni1, kni2 = jax.random.split(key, 7)

    params = init_params(kp, n_users, n_items, emb_dim)

    pos_u = jax.random.randint(ku, (batch_size,), 0, n_users, jnp.int32)
    pos_i_1 = jax.random.randint(ki1, (batch_size,), 0, n_items, jnp.int32)
    pos_i_2 = jax.random.randint(ki2, (batch_size,), 0, n_items, jnp.int32)
    neg_u = jax.random.randint(knu, (batch_size, n_neg), 0, n_users, jnp.int32)
    neg_i_1 = jax.random.randint(kni1, (batch_size, n_neg), 0, n_items, jnp.int32)
    neg_i_2 = jax.random.randint(kni2, (batch_size, n_neg), 0, n_items, jnp.int32)

    out = triple2vec_forward(params, pos_u, pos_i_1, pos_i_2,
                             neg_u, neg_i_1, neg_i_2, batch_size)
    out = jax.block_until_ready(out)

    ref = _reference_forward(params, pos_u, pos_i_1, pos_i_2,
                             neg_u, neg_i_1, neg_i_2, batch_size)
    assert jnp.allclose(out, ref, atol=1e-4, rtol=1e-4), (out, ref)

    print("KERNEL_OK")
</pallas_src>

<mosaic_0001>
module attributes {stable_mosaic.version = 11 : i64} {
  func.func @_triple2vec_kernel(%arg0: i32, %arg1: memref<8x128xf32, #tpu.memory_space<vmem>>, %arg2: memref<8x384xf32, #tpu.memory_space<vmem>>, %arg3: memref<96x384xf32, #tpu.memory_space<vmem>>, %arg4: memref<384x12xf32, #tpu.memory_space<vmem>>, %arg5: memref<1x8x128xf32, #tpu.memory_space<vmem>>) attributes {dimension_semantics = [#tpu.dimension_semantics<parallel>], iteration_bounds = array<i64: 1>, scalar_prefetch = 0 : i64, scratch_operands = 0 : i64, tpu.core_type = #tpu.core_type<tc>, window_params = [{transform_indices = @transform_0, window_bounds = array<i64: 8, 128>}, {transform_indices = @transform_1, window_bounds = array<i64: 8, 384>}, {pipeline_mode = #tpu.pipeline_mode<synchronous>, transform_indices = @transform_2, window_bounds = array<i64: 96, 384>}, {pipeline_mode = #tpu.pipeline_mode<synchronous>, transform_indices = @transform_3, window_bounds = array<i64: 384, 12>}, {transform_indices = @transform_4, window_bounds = array<i64: 1, 8, 128>}]} {
    %c8_i32 = arith.constant 8 : i32
    %0 = arith.muli %arg0, %c8_i32 : i32
    %1 = tpu.iota {dimensions = array<i32: 0>} : vector<8x1xi32>
    %2 = vector.broadcast %0 : i32 to vector<8x1xi32>
    %3 = arith.addi %2, %1 : vector<8x1xi32>
    %c8_i32_0 = arith.constant 8 : i32
    %4 = vector.broadcast %c8_i32_0 : i32 to vector<8x1xi32>
    %5 = arith.cmpi slt, %3, %4 : vector<8x1xi32>
    %6 = arith.extui %5 : vector<8x1xi1> to vector<8x1xi32>
    %7 = arith.sitofp %6 : vector<8x1xi32> to vector<8x1xf32>
    %c0 = arith.constant 0 : index
    %c0_1 = arith.constant 0 : index
    %8 = vector.load %arg1[%c0, %c0_1] : memref<8x128xf32, #tpu.memory_space<vmem>>, vector<8x128xf32>
    %c0_2 = arith.constant 0 : index
    %c0_3 = arith.constant 0 : index
    %9 = vector.load %arg2[%c0_2, %c0_3] : memref<8x384xf32, #tpu.memory_space<vmem>>, vector<8x384xf32>
    %c0_4 = arith.constant 0 : index
    %c0_5 = arith.constant 0 : index
    %10 = vector.load %arg3[%c0_4, %c0_5] : memref<96x384xf32, #tpu.memory_space<vmem>>, vector<96x384xf32>
    %c0_6 = arith.constant 0 : index
    %c0_7 = arith.constant 0 : index
    %11 = vector.load %arg4[%c0_6, %c0_7] : memref<384x12xf32, #tpu.memory_space<vmem>>, vector<384x12xf32>
    %12 = vector.extract_strided_slice %8 {offsets = [0, 0], sizes = [8, 32], strides = [1, 1]} : vector<8x128xf32> to vector<8x32xf32>
    %13 = vector.extract_strided_slice %8 {offsets = [0, 32], sizes = [8, 32], strides = [1, 1]} : vector<8x128xf32> to vector<8x32xf32>
    %14 = vector.extract_strided_slice %8 {offsets = [0, 64], sizes = [8, 32], strides = [1, 1]} : vector<8x128xf32> to vector<8x32xf32>
    %15 = vector.extract_strided_slice %8 {offsets = [0, 0], sizes = [8, 96], strides = [1, 1]} : vector<8x128xf32> to vector<8x96xf32>
    %16 = vector.extract_strided_slice %8 {offsets = [0, 96], sizes = [8, 3], strides = [1, 1]} : vector<8x128xf32> to vector<8x3xf32>
    %17 = vector.extract_strided_slice %8 {offsets = [0, 99], sizes = [8, 12], strides = [1, 1]} : vector<8x128xf32> to vector<8x12xf32>
    %18 = arith.mulf %12, %13 : vector<8x32xf32>
    %cst = arith.constant dense<0.000000e+00> : vector<8xf32>
    %19 = vector.multi_reduction <add>, %18, %cst [1] : vector<8x32xf32> to vector<8xf32>
    %20 = vector.shape_cast %19 : vector<8xf32> to vector<8x1xf32>
    %21 = arith.mulf %12, %14 : vector<8x32xf32>
    %cst_8 = arith.constant dense<0.000000e+00> : vector<8xf32>
    %22 = vector.multi_reduction <add>, %21, %cst_8 [1] : vector<8x32xf32> to vector<8xf32>
    %23 = vector.shape_cast %22 : vector<8xf32> to vector<8x1xf32>
    %24 = arith.mulf %13, %14 : vector<8x32xf32>
    %cst_9 = arith.constant dense<0.000000e+00> : vector<8xf32>
    %25 = vector.multi_reduction <add>, %24, %cst_9 [1] : vector<8x32xf32> to vector<8xf32>
    %26 = vector.shape_cast %25 : vector<8xf32> to vector<8x1xf32>
    %27 = arith.addf %20, %23 : vector<8x1xf32>
    %28 = arith.addf %20, %26 : vector<8x1xf32>
    %29 = arith.addf %23, %26 : vector<8x1xf32>
    %30 = tpu.concatenate %27, %28, %29 in 1 : vector<8x1xf32>, vector<8x1xf32>, vector<8x1xf32> -> vector<8x3xf32>
    %31 = arith.addf %30, %16 : vector<8x3xf32>
    %cst_10 = arith.constant dense<0.000000e+00> : vector<8x384xf32>
    %32 = tpu.matmul %15, %10, %cst_10 {dimension_numbers = #tpu.dot_dimension_numbers<[1], [0], [0], [1], [0, 0, 1, 1], [], []>} : vector<8x96xf32>, vector<96x384xf32>, vector<8x384xf32> -> vector<8x384xf32>
    %33 = arith.mulf %9, %32 : vector<8x384xf32>
    %cst_11 = arith.constant dense<0.000000e+00> : vector<8x12xf32>
    %34 = tpu.matmul %33, %11, %cst_11 {dimension_numbers = #tpu.dot_dimension_numbers<[1], [0], [0], [1], [0, 0, 1, 1], [], []>} : vector<8x384xf32>, vector<384x12xf32>, vector<8x12xf32> -> vector<8x12xf32>
    %35 = arith.addf %34, %17 : vector<8x12xf32>
    %cst_12 = arith.constant 0.000000e+00 : f32
    %36 = vector.broadcast %cst_12 : f32 to vector<8x3xf32>
    %37 = arith.minimumf %31, %36 : vector<8x3xf32>
    %38 = math.absf %31 : vector<8x3xf32>
    %cst_13 = arith.constant 0.000000e+00 : f32
    %39 = vector.broadcast %cst_13 : f32 to vector<8x3xf32>
    %40 = arith.subf %39, %38 : vector<8x3xf32>
    %41 = math.exp %40 : vector<8x3xf32>
    %42 = math.log1p %41 : vector<8x3xf32>
    %43 = arith.subf %37, %42 : vector<8x3xf32>
    %cst_14 = arith.constant dense<0.000000e+00> : vector<8xf32>
    %44 = vector.multi_reduction <add>, %43, %cst_14 [1] : vector<8x3xf32> to vector<8xf32>
    %45 = vector.shape_cast %44 : vector<8xf32> to vector<8x1xf32>
    %cst_15 = arith.constant 0.000000e+00 : f32
    %46 = vector.broadcast %cst_15 : f32 to vector<8x12xf32>
    %47 = arith.subf %46, %35 : vector<8x12xf32>
    %cst_16 = arith.constant 0.000000e+00 : f32
    %48 = vector.broadcast %cst_16 : f32 to vector<8x12xf32>
    %49 = arith.minimumf %47, %48 : vector<8x12xf32>
    %50 = math.absf %47 : vector<8x12xf32>
    %cst_17 = arith.constant 0.000000e+00 : f32
    %51 = vector.broadcast %cst_17 : f32 to vector<8x12xf32>
    %52 = arith.subf %51, %50 : vector<8x12xf32>
    %53 = math.exp %52 : vector<8x12xf32>
    %54 = math.log1p %53 : vector<8x12xf32>
    %55 = arith.subf %49, %54 : vector<8x12xf32>
    %cst_18 = arith.constant dense<0.000000e+00> : vector<8xf32>
    %56 = vector.multi_reduction <add>, %55, %cst_18 [1] : vector<8x12xf32> to vector<8xf32>
    %57 = vector.shape_cast %56 : vector<8xf32> to vector<8x1xf32>
    %58 = arith.addf %45, %57 : vector<8x1xf32>
    %59 = arith.mulf %58, %7 : vector<8x1xf32>
    %60 = vector.shape_cast %59 : vector<8x1xf32> to vector<1x8x1xf32>
    %cst_19 = arith.constant dense<0.000000e+00> : vector<1xf32>
    %61 = vector.multi_reduction <add>, %60, %cst_19 [1, 2] : vector<1x8x1xf32> to vector<1xf32>
    %62 = vector.shape_cast %61 : vector<1xf32> to vector<1x1x1xf32>
    %63 = vector.extract %62[0, 0, 0] : f32 from vector<1x1x1xf32>
    %64 = tpu.iota {dimensions = array<i32: 1>} : vector<1x8x128xi32>
    %65 = tpu.iota {dimensions = array<i32: 2>} : vector<1x8x128xi32>
    %c0_i32 = arith.constant 0 : i32
    %66 = vector.broadcast %c0_i32 : i32 to vector<1x8x128xi32>
    %67 = arith.cmpi eq, %64, %66 : vector<1x8x128xi32>
    %c0_i32_20 = arith.constant 0 : i32
    %68 = vector.broadcast %c0_i32_20 : i32 to vector<1x8x128xi32>
    %69 = arith.cmpi eq, %65, %68 : vector<1x8x128xi32>
    %70 = arith.andi %67, %69 : vector<1x8x128xi1>
    %cst_21 = arith.constant 0.000000e+00 : f32
    %71 = vector.broadcast %63 : f32 to vector<1x8x128xf32>
    %72 = vector.broadcast %cst_21 : f32 to vector<1x8x128xf32>
    %73 = arith.select %70, %71, %72 : vector<1x8x128xi1>, vector<1x8x128xf32>
    %c0_22 = arith.constant 0 : index
    %c0_23 = arith.constant 0 : index
    %c0_24 = arith.constant 0 : index
    %74 = vector.load %arg5[%c0_22, %c0_23, %c0_24] : memref<1x8x128xf32, #tpu.memory_space<vmem>>, vector<1x8x128xf32>
    tpu.vector_store %arg5[%c0_22, %c0_23, %c0_24], %73 {strides = array<i32>} : memref<1x8x128xf32, #tpu.memory_space<vmem>>, vector<1x8x128xf32>,
    return
  }
  func.func @transform_0(%arg0: i32) -> (i32, i32) {
    %c0_i32 = arith.constant 0 : i32
    %c0_i32_0 = arith.constant 0 : i32
    return %arg0, %c0_i32 : i32, i32
  }
  func.func @transform_1(%arg0: i32) -> (i32, i32) {
    %c0_i32 = arith.constant 0 : i32
    %c0_i32_0 = arith.constant 0 : i32
    return %arg0, %c0_i32 : i32, i32
  }
  func.func @transform_2(%arg0: i32) -> (i32, i32) {
    %c0_i32 = arith.constant 0 : i32
    %c0_i32_0 = arith.constant 0 : i32
    %c0_i32_1 = arith.constant 0 : i32
    return %c0_i32, %c0_i32_0 : i32, i32
  }
  func.func @transform_3(%arg0: i32) -> (i32, i32) {
    %c0_i32 = arith.constant 0 : i32
    %c0_i32_0 = arith.constant 0 : i32
    %c0_i32_1 = arith.constant 0 : i32
    return %c0_i32, %c0_i32_0 : i32, i32
  }
  func.func @transform_4(%arg0: i32) -> (i32, i32, i32) {
    %c0_i32 = arith.constant 0 : i32
    %c0_i32_0 = arith.constant 0 : i32
    %c0_i32_1 = arith.constant 0 : i32
    return %arg0, %c0_i32, %c0_i32_0 : i32, i32, i32
  }
}

</mosaic_0001>

<llo_original>
// kernel: tpu_custom_call.1
$region0: #{tpu_custom_call.1}
  #allocation0 [shape = 'u32[]', space=smem, size = 0x4, offset = 0x4, fixed_abs, tag = 'smem constant byte address 0x4 - core index']
  #allocation1 [shape = 'u32[144,128]{1,0:T(1,128)}', space=vmem, size = 0x12000, scoped, tag = 'internal scratch']
  %s0 = inlined_call_operand.vmem [shape: f32[8,128], index: 0, kind: input, shape index: {}]
  %s1 = inlined_call_operand.vmem [shape: f32[8,384], index: 1, kind: input, shape index: {}]
  %s2 = inlined_call_operand.vmem [shape: f32[96,384], index: 2, kind: input, shape index: {}]
  %s3 = inlined_call_operand.vmem [shape: f32[384,12], index: 3, kind: input, shape index: {}]
  %s4 = inlined_call_operand.hbm [shape: f32[1,8,128], index: 4, kind: output, shape index: {}]
  %s5 = sld [smem:[#allocation0]]
  $region26: #{tpu_custom_call.1} parent=0
    _
  %s7 = ssub.s32 1, %s5
  %s8 = scalar_select 0, %s7, %s5
  $region1: #{tpu_custom_call.1} parent=0
    #allocation2 [shape = 'u8[4096]{0}', space=vmem, size = 0x1000, scoped, tag = 'output window, operand 0, single buffered']
    #allocation3 [shape = 's32[1]{0}', space=sflag, size = 0x4, scoped, tag = 'scoped memory for tpu_custom_call.1']
    %9 = vsyncpa [#allocation3], 0
    // Predicated region
    $region2: #{tpu_custom_call.1} parent=1 // pred_check
      _
    $region3: #{tpu_custom_call.1} parent=1 // pred_check_branch
      %11 = sbr.rel (0) target = $region5
    $region4: #{tpu_custom_call.1} parent=1 // pred_region
      _
    $region5: #{tpu_custom_call.1} parent=1 // pred_fallthru
      _
    // Predicated region
    $region6: #{tpu_custom_call.1} parent=1 // pred_check
      _
    $region7: #{tpu_custom_call.1} parent=1 // pred_check_branch
      %13 = sbr.rel (0) target = $region9
    $region8: #{tpu_custom_call.1} parent=1 // pred_region
      _
    $region9: #{tpu_custom_call.1} parent=1 // pred_fallthru
      _
    // Predicated region
    $region10: #{tpu_custom_call.1} parent=1 // pred_check
      _
    $region11: #{tpu_custom_call.1} parent=1 // pred_check_branch
      %15 = sbr.rel (0) target = $region13
    $region12: #{tpu_custom_call.1} parent=1 // pred_region
      _
    $region13: #{tpu_custom_call.1} parent=1 // pred_fallthru
      _
    // Predicated region
    $region14: #{tpu_custom_call.1} parent=1 // pred_check
      _
    $region15: #{tpu_custom_call.1} parent=1 // pred_check_branch
      %17 = sbr.rel (0) target = $region17
    $region16: #{tpu_custom_call.1} parent=1 // pred_region
      _
    $region17: #{tpu_custom_call.1} parent=1 // pred_fallthru
      _
    %s18 = smul.u32 0, 8
    %v19 = vlaneseq
    %v20 = vshrl.u32 %v19, 7
    %v21 = vstv %s18
    %v22 = vadd.s32 %v21, %v20
    %vm23 = vcmp.lt.s32.totalorder %v22, 8
    %v24 = vsel %vm23, 1, 0
    %v25 = vcvt.s32.f32 %v24
    %v26 = vld [vmem:[%s0] sm:$0xff]
    %v27 = vld [vmem:[%s1] sm:$0xff]
    %v28 = vld [vmem:[%s1 + $0x8] sm:$0xff]
    %v29 = vld [vmem:[%s1 + $0x10] sm:$0xff]
    %v30 = vld [vmem:[%s2] sm:$0xff]
    %v31 = vld [vmem:[%s2 + $0x8] sm:$0xff]
    %v32 = vld [vmem:[%s2 + $0x10] sm:$0xff]
    %v33 = vld [vmem:[%s2 + $0x18] sm:$0xff]
    %v34 = vld [vmem:[%s2 + $0x20] sm:$0xff]
    %v35 = vld [vmem:[%s2 + $0x28] sm:$0xff]
    %v36 = vld [vmem:[%s2 + $0x30] sm:$0xff]
    %v37 = vld [vmem:[%s2 + $0x38] sm:$0xff]
    %v38 = vld [vmem:[%s2 + $0x40] sm:$0xff]
    %v39 = vld [vmem:[%s2 + $0x48] sm:$0xff]
    %v40 = vld [vmem:[%s2 + $0x50] sm:$0xff]
    %v41 = vld [vmem:[%s2 + $0x58] sm:$0xff]
    %v42 = vld [vmem:[%s2 + $0x60] sm:$0xff]
    %v43 = vld [vmem:[%s2 + $0x68] sm:$0xff]
    %v44 = vld [vmem:[%s2 + $0x70] sm:$0xff]
    %v45 = vld [vmem:[%s2 + $0x78] sm:$0xff]
    %v46 = vld [vmem:[%s2 + $0x80] sm:$0xff]
    %v47 = vld [vmem:[%s2 + $0x88] sm:$0xff]
    %v48 = vld [vmem:[%s2 + $0x90] sm:$0xff]
    %v49 = vld [vmem:[%s2 + $0x98] sm:$0xff]
    %v50 = vld [vmem:[%s2 + $0xa0] sm:$0xff]
    %v51 = vld [vmem:[%s2 + $0xa8] sm:$0xff]
    %v52 = vld [vmem:[%s2 + $0xb0] sm:$0xff]
    %v53 = vld [vmem:[%s2 + $0xb8] sm:$0xff]
    %v54 = vld [vmem:[%s2 + $0xc0] sm:$0xff]
    %v55 = vld [vmem:[%s2 + $0xc8] sm:$0xff]
    %v56 = vld [vmem:[%s2 + $0xd0] sm:$0xff]
    %v57 = vld [vmem:[%s2 + $0xd8] sm:$0xff]
    %v58 = vld [vmem:[%s2 + $0xe0] sm:$0xff]
    %v59 = vld [vmem:[%s2 + $0xe8] sm:$0xff]
    %v60 = vld [vmem:[%s2 + $0xf0] sm:$0xff]
    %v61 = vld [vmem:[%s2 + $0xf8] sm:$0xff]
    %v62 = vld [vmem:[%s2 + $0x100] sm:$0xff]
    %v63 = vld [vmem:[%s2 + $0x108] sm:$0xff]
    %v64 = vld [vmem:[%s2 + $0x110] sm:$0xff]
    %v65 = vld [vmem:[%s2 + $0x118] sm:$0xff]
    %v66 = vld [vmem:[%s3] sm:$0xff]
    %v67 = vld [vmem:[%s3 + $0x8] sm:$0xff]
    %v68 = vld [vmem:[%s3 + $0x10] sm:$0xff]
    %v69 = vld [vmem:[%s3 + $0x18] sm:$0xff]
    %v70 = vld [vmem:[%s3 + $0x20] sm:$0xff]
    %v71 = vld [vmem:[%s3 + $0x28] sm:$0xff]
    %v72 = vld [vmem:[%s3 + $0x30] sm:$0xff]
    %v73 = vld [vmem:[%s3 + $0x38] sm:$0xff]
    %v74 = vld [vmem:[%s3 + $0x40] sm:$0xff]
    %v75 = vld [vmem:[%s3 + $0x48] sm:$0xff]
    %v76 = vld [vmem:[%s3 + $0x50] sm:$0xff]
    %v77 = vld [vmem:[%s3 + $0x58] sm:$0xff]
    %v78 = vld [vmem:[%s3 + $0x60] sm:$0xff]
    %v79 = vld [vmem:[%s3 + $0x68] sm:$0xff]
    %v80 = vld [vmem:[%s3 + $0x70] sm:$0xff]
    %v81 = vld [vmem:[%s3 + $0x78] sm:$0xff]
    %v82 = vld [vmem:[%s3 + $0x80] sm:$0xff]
    %v83 = vld [vmem:[%s3 + $0x88] sm:$0xff]
    %v84 = vld [vmem:[%s3 + $0x90] sm:$0xff]
    %v85 = vld [vmem:[%s3 + $0x98] sm:$0xff]
    %v86 = vld [vmem:[%s3 + $0xa0] sm:$0xff]
    %v87 = vld [vmem:[%s3 + $0xa8] sm:$0xff]
    %v88 = vld [vmem:[%s3 + $0xb0] sm:$0xff]
    %v89 = vld [vmem:[%s3 + $0xb8] sm:$0xff]
    %v90 = vld [vmem:[%s3 + $0xc0] sm:$0xff]
    %v91 = vld [vmem:[%s3 + $0xc8] sm:$0xff]
    %v92 = vld [vmem:[%s3 + $0xd0] sm:$0xff]
    %v93 = vld [vmem:[%s3 + $0xd8] sm:$0xff]
    %v94 = vld [vmem:[%s3 + $0xe0] sm:$0xff]
    %v95 = vld [vmem:[%s3 + $0xe8] sm:$0xff]
    %v96 = vld [vmem:[%s3 + $0xf0] sm:$0xff]
    %v97 = vld [vmem:[%s3 + $0xf8] sm:$0xff]
    %v98 = vld [vmem:[%s3 + $0x100] sm:$0xff]
    %v99 = vld [vmem:[%s3 + $0x108] sm:$0xff]
    %v100 = vld [vmem:[%s3 + $0x110] sm:$0xff]
    %v101 = vld [vmem:[%s3 + $0x118] sm:$0xff]
    %v102 = vld [vmem:[%s3 + $0x120] sm:$0xff]
    %v103 = vld [vmem:[%s3 + $0x128] sm:$0xff]
    %v104 = vld [vmem:[%s3 + $0x130] sm:$0xff]
    %v105 = vld [vmem:[%s3 + $0x138] sm:$0xff]
    %v106 = vld [vmem:[%s3 + $0x140] sm:$0xff]
    %v107 = vld [vmem:[%s3 + $0x148] sm:$0xff]
    %v108 = vld [vmem:[%s3 + $0x150] sm:$0xff]
    %v109 = vld [vmem:[%s3 + $0x158] sm:$0xff]
    %v110 = vld [vmem:[%s3 + $0x160] sm:$0xff]
    %v111 = vld [vmem:[%s3 + $0x168] sm:$0xff]
    %v112 = vld [vmem:[%s3 + $0x170] sm:$0xff]
    %v113 = vld [vmem:[%s3 + $0x178] sm:$0xff]
    %115 = vrot.lane.b32.xlu0 %v26, 96
    %v116 = vpop.permute.xlu0 %115
    %v118 = vmul.f32 %v26, %v116
    %vm119 = vcmask 261120
    %v120 = vsel %vm119, %v118, 0.0
    %121 = vadd.xlane.f32.xlu0 %v120
    %v122 = vpop.xlane.xlu0 %121
    %123 = vrot.lane.b32.xlu0 %v26, 64
    %v124 = vpop.permute.xlu0 %123
    %v126 = vmul.f32 %v26, %v124
    %v127 = vsel %vm119, %v126, 0.0
    %128 = vadd.xlane.f32.xlu0 %v127
    %v129 = vpop.xlane.xlu0 %128
    %131 = vrot.lane.b32.xlu0 %v118, 96
    %v132 = vpop.permute.xlu0 %131
    %v134 = vsel %vm119, %v132, 0.0
    %135 = vadd.xlane.f32.xlu0 %v134
    %v136 = vpop.xlane.xlu0 %135
    %v137 = vadd.f32 %v122, %v129
    %v138 = vadd.f32 %v122, %v136
    %v139 = vadd.f32 %v129, %v136
    %vm140 = vcmask 7168
    %v141 = vsel %vm140, %v137, %v138
    %vm142 = vcmask 15360
    %v143 = vsel %vm142, %v141, %v139
    %144 = vrot.lane.b32.xlu0 %v26, 32
    %v145 = vpop.permute.xlu0 %144
    %v147 = vadd.f32 %v143, %v145
    %vm148 = vcmask 785408
    %v149 = vsel %vm148, %v26, 0
    %151 = vmatprep.subr.mxu0 %v31
    %152 = vmatpush1.msra.mxu0 %v30
    %153 = vmatprep.subr.mxu0 %v34
    %154 = vmatpush1.msra.mxu0 %v33
    %155 = vmatprep.subr.mxu0 %v37
    %156 = vmatpush1.msra.mxu0 %v36
    %157 = vmatprep.subr.mxu0 %v40
    %158 = vmatpush1.msra.mxu0 %v39
    %159 = vmatprep.subr.mxu0 %v43
    %160 = vmatpush1.msra.mxu0 %v42
    %161 = vmatprep.subr.mxu0 %v46
    %162 = vmatpush1.msra.mxu0 %v45
    %163 = vmatprep.subr.mxu0 %v49
    %164 = vmatpush1.msra.mxu0 %v48
    %165 = vmatprep.subr.mxu0 %v52
    %166 = vmatpush1.msra.mxu0 %v51
    %167 = vmatprep.subr.mxu0 %v55
    %168 = vmatpush1.msra.mxu0 %v54
    %169 = vmatprep.subr.mxu0 %v58
    %170 = vmatpush1.msra.mxu0 %v57
    %171 = vmatprep.subr.mxu0 %v61
    %172 = vmatpush1.msra.mxu0 %v60
    %173 = vmatprep.subr.mxu0 %v64
    %174 = vmatpush1.msra.mxu0 %v63
    %175 = vmatprep.subr.mxu0 0.0
    %176 = vmatpush1.msra.mxu0 0.0
    %177 = vmatprep.subr.mxu0 0.0
    %178 = vmatpush1.msra.mxu0 0.0
    %179 = vmatprep.subr.mxu0 0.0
    %180 = vmatpush1.msra.mxu0 0.0
    %181 = vmatprep.subr.mxu0 0.0
    %182 = vmatpush1.msra.mxu0 0.0
    %183 = vmatprep.subr.mxu0 0.0
    %184 = vmatpush1.msra.mxu0 0.0
    %185 = vmatprep.subr.mxu0 0.0
    %186 = vmatpush1.msra.mxu0 0.0
    %187 = vmatprep.subr.mxu0 0.0
    %188 = vmatpush1.msra.mxu0 0.0
    %189 = vmatprep.subr.mxu0 0.0
    %190 = vmatpush1.msra.mxu0 0.0
    %191 = vmatprep.subr.mxu0 0.0
    %192 = vmatpush1.msra.mxu0 0.0
    %193 = vmatprep.subr.mxu0 0.0
    %194 = vmatpush1.msra.mxu0 0.0
    %195 = vmatprep.subr.mxu0 0.0
    %196 = vmatpush1.msra.mxu0 0.0
    %197 = vmatprep.subr.mxu0 0.0
    %198 = vmatpush1.msra.mxu0 0.0
    %199 = vmatprep.subr.mxu0 0.0
    %200 = vmatpush1.msra.mxu0 0.0
    %201 = vmatprep.subr.mxu0 0.0
    %202 = vmatpush1.msra.mxu0 0.0
    %203 = vmatprep.subr.mxu0 0.0
    %204 = vmatpush1.msra.mxu0 0.0
    %205 = vmatprep.subr.mxu0 0.0
    %206 = vmatpush1.msra.mxu0 0.0
    %207 = vmatprep.subr.mxu0 0.0
    %208 = vmatpush1.msra.mxu0 0.0
    %209 = vmatprep.subr.mxu0 0.0
    %210 = vmatpush1.msra.mxu0 0.0
    %211 = vmatprep.subr.mxu0 0.0
    %212 = vmatpush1.msra.mxu0 0.0
    %213 = vmatprep.subr.mxu0 0.0
    %214 = vmatpush1.msra.mxu0 0.0
    %215 = vmatprep.mubr.f32.mxu0 0.0
    %216 = vmatmul.mubr.f32.gmra.mrb[0].mxu0 %v149
    %v217 = vpop.f32.mrb[0].mxu0
    %v218 = vadd.f32 0.0, %v217
    %v219 = vpop.f32.mrb[0].mxu0
    %v220 = vadd.f32 0.0, %v219
    %221 = vdwg.mxu0
    %222 = vmatprep.subr.mxu0 0.0
    %223 = vmatpush1.msra.mxu0 %v32
    %224 = vmatprep.subr.mxu0 0.0
    %225 = vmatpush1.msra.mxu0 %v35
    %226 = vmatprep.subr.mxu0 0.0
    %227 = vmatpush1.msra.mxu0 %v38
    %228 = vmatprep.subr.mxu0 0.0
    %229 = vmatpush1.msra.mxu0 %v41
    %230 = vmatprep.subr.mxu0 0.0
    %231 = vmatpush1.msra.mxu0 %v44
    %232 = vmatprep.subr.mxu0 0.0
    %233 = vmatpush1.msra.mxu0 %v47
    %234 = vmatprep.subr.mxu0 0.0
    %235 = vmatpush1.msra.mxu0 %v50
    %236 = vmatprep.subr.mxu0 0.0
    %237 = vmatpush1.msra.mxu0 %v53
    %238 = vmatprep.subr.mxu0 0.0
    %239 = vmatpush1.msra.mxu0 %v56
    %240 = vmatprep.subr.mxu0 0.0
    %241 = vmatpush1.msra.mxu0 %v59
    %242 = vmatprep.subr.mxu0 0.0
    %243 = vmatpush1.msra.mxu0 %v62
    %244 = vmatprep.subr.mxu0 0.0
    %245 = vmatpush1.msra.mxu0 %v65
    %246 = vmatprep.subr.mxu0 0.0
    %247 = vmatpush1.msra.mxu0 0.0
    %248 = vmatprep.subr.mxu0 0.0
    %249 = vmatpush1.msra.mxu0 0.0
    %250 = vmatprep.subr.mxu0 0.0
    %251 = vmatpush1.msra.mxu0 0.0
    %252 = vmatprep.subr.mxu0 0.0
    %253 = vmatpush1.msra.mxu0 0.0
    %254 = vmatprep.subr.mxu0 0.0
    %255 = vmatpush1.msra.mxu0 0.0
    %256 = vmatprep.subr.mxu0 0.0
    %257 = vmatpush1.msra.mxu0 0.0
    %258 = vmatprep.subr.mxu0 0.0
    %259 = vmatpush1.msra.mxu0 0.0
    %260 = vmatprep.subr.mxu0 0.0
    %261 = vmatpush1.msra.mxu0 0.0
    %262 = vmatprep.subr.mxu0 0.0
    %263 = vmatpush1.msra.mxu0 0.0
    %264 = vmatprep.subr.mxu0 0.0
    %265 = vmatpush1.msra.mxu0 0.0
    %266 = vmatprep.subr.mxu0 0.0
    %267 = vmatpush1.msra.mxu0 0.0
    %268 = vmatprep.subr.mxu0 0.0
    %269 = vmatpush1.msra.mxu0 0.0
    %270 = vmatprep.subr.mxu0 0.0
    %271 = vmatpush1.msra.mxu0 0.0
    %272 = vmatprep.subr.mxu0 0.0
    %273 = vmatpush1.msra.mxu0 0.0
    %274 = vmatprep.subr.mxu0 0.0
    %275 = vmatpush1.msra.mxu0 0.0
    %276 = vmatprep.subr.mxu0 0.0
    %277 = vmatpush1.msra.mxu0 0.0
    %278 = vmatprep.subr.mxu0 0.0
    %279 = vmatpush1.msra.mxu0 0.0
    %280 = vmatprep.subr.mxu0 0.0
    %281 = vmatpush1.msra.mxu0 0.0
    %282 = vmatprep.subr.mxu0 0.0
    %283 = vmatpush1.msra.mxu0 0.0
    %284 = vmatprep.subr.mxu0 0.0
    %285 = vmatpush1.msra.mxu0 0.0
    %286 = vmatprep.mubr.f32.mxu0 0.0
    %287 = vmatmul.mubr.f32.gmra.mrb[0].mxu0 %v149
    %v288 = vpop.f32.mrb[0].mxu0
    %v289 = vadd.f32 0.0, %v288
    %v290 = vpop.f32.mrb[0].mxu0
    %291 = vdwg.mxu0
    %v292 = vmul.f32 %v27, %v218
    %v293 = vmul.f32 %v28, %v220
    %v294 = vmul.f32 %v29, %v289
    %295 = vrot.lane.b32.xlu0 %v26, 29
    %v296 = vpop.permute.xlu0 %295
    %298 = vmatprep.subr.mxu0 0.0
    %299 = vmatpush1.msra.mxu0 %v66
    %300 = vmatprep.subr.mxu0 0.0
    %301 = vmatpush1.msra.mxu0 %v67
    %302 = vmatprep.subr.mxu0 0.0
    %303 = vmatpush1.msra.mxu0 %v68
    %304 = vmatprep.subr.mxu0 0.0
    %305 = vmatpush1.msra.mxu0 %v69
    %306 = vmatprep.subr.mxu0 0.0
    %307 = vmatpush1.msra.mxu0 %v70
    %308 = vmatprep.subr.mxu0 0.0
    %309 = vmatpush1.msra.mxu0 %v71
    %310 = vmatprep.subr.mxu0 0.0
    %311 = vmatpush1.msra.mxu0 %v72
    %312 = vmatprep.subr.mxu0 0.0
    %313 = vmatpush1.msra.mxu0 %v73
    %314 = vmatprep.subr.mxu0 0.0
    %315 = vmatpush1.msra.mxu0 %v74
    %316 = vmatprep.subr.mxu0 0.0
    %317 = vmatpush1.msra.mxu0 %v75
    %318 = vmatprep.subr.mxu0 0.0
    %319 = vmatpush1.msra.mxu0 %v76
    %320 = vmatprep.subr.mxu0 0.0
    %321 = vmatpush1.msra.mxu0 %v77
    %322 = vmatprep.subr.mxu0 0.0
    %323 = vmatpush1.msra.mxu0 %v78
    %324 = vmatprep.subr.mxu0 0.0
    %325 = vmatpush1.msra.mxu0 %v79
    %326 = vmatprep.subr.mxu0 0.0
    %327 = vmatpush1.msra.mxu0 %v80
    %328 = vmatprep.subr.mxu0 0.0
    %329 = vmatpush1.msra.mxu0 %v81
    %330 = vmatprep.subr.mxu0 0.0
    %331 = vmatpush1.msra.mxu0 %v82
    %332 = vmatprep.subr.mxu0 0.0
    %333 = vmatpush1.msra.mxu0 %v83
    %334 = vmatprep.subr.mxu0 0.0
    %335 = vmatpush1.msra.mxu0 %v84
    %336 = vmatprep.subr.mxu0 0.0
    %337 = vmatpush1.msra.mxu0 %v85
    %338 = vmatprep.subr.mxu0 0.0
    %339 = vmatpush1.msra.mxu0 %v86
    %340 = vmatprep.subr.mxu0 0.0
    %341 = vmatpush1.msra.mxu0 %v87
    %342 = vmatprep.subr.mxu0 0.0
    %343 = vmatpush1.msra.mxu0 %v88
    %344 = vmatprep.subr.mxu0 0.0
    %345 = vmatpush1.msra.mxu0 %v89
    %346 = vmatprep.subr.mxu0 0.0
    %347 = vmatpush1.msra.mxu0 %v90
    %348 = vmatprep.subr.mxu0 0.0
    %349 = vmatpush1.msra.mxu0 %v91
    %350 = vmatprep.subr.mxu0 0.0
    %351 = vmatpush1.msra.mxu0 %v92
    %352 = vmatprep.subr.mxu0 0.0
    %353 = vmatpush1.msra.mxu0 %v93
    %354 = vmatprep.subr.mxu0 0.0
    %355 = vmatpush1.msra.mxu0 %v94
    %356 = vmatprep.subr.mxu0 0.0
    %357 = vmatpush1.msra.mxu0 %v95
    %358 = vmatprep.subr.mxu0 0.0
    %359 = vmatpush1.msra.mxu0 %v96
    %360 = vmatprep.subr.mxu0 0.0
    %361 = vmatpush1.msra.mxu0 %v97
    %362 = vmatprep.mubr.f32.mxu0 %v293
    %363 = vmatmul.mubr.f32.gmra.mrb[0].mxu0 %v292
    %v364 = vpop.f32.mrb[0].mxu0
    %v365 = vadd.f32 %v296, %v364
    %v366 = vpop.f32.mrb[0].mxu0
    %367 = vdwg.mxu0
    %368 = vmatprep.subr.mxu0 0.0
    %369 = vmatpush1.msra.mxu0 %v98
    %370 = vmatprep.subr.mxu0 0.0
    %371 = vmatpush1.msra.mxu0 %v99
    %372 = vmatprep.subr.mxu0 0.0
    %373 = vmatpush1.msra.mxu0 %v100
    %374 = vmatprep.subr.mxu0 0.0
    %375 = vmatpush1.msra.mxu0 %v101
    %376 = vmatprep.subr.mxu0 0.0
    %377 = vmatpush1.msra.mxu0 %v102
    %378 = vmatprep.subr.mxu0 0.0
    %379 = vmatpush1.msra.mxu0 %v103
    %380 = vmatprep.subr.mxu0 0.0
    %381 = vmatpush1.msra.mxu0 %v104
    %382 = vmatprep.subr.mxu0 0.0
    %383 = vmatpush1.msra.mxu0 %v105
    %384 = vmatprep.subr.mxu0 0.0
    %385 = vmatpush1.msra.mxu0 %v106
    %386 = vmatprep.subr.mxu0 0.0
    %387 = vmatpush1.msra.mxu0 %v107
    %388 = vmatprep.subr.mxu0 0.0
    %389 = vmatpush1.msra.mxu0 %v108
    %390 = vmatprep.subr.mxu0 0.0
    %391 = vmatpush1.msra.mxu0 %v109
    %392 = vmatprep.subr.mxu0 0.0
    %393 = vmatpush1.msra.mxu0 %v110
    %394 = vmatprep.subr.mxu0 0.0
    %395 = vmatpush1.msra.mxu0 %v111
    %396 = vmatprep.subr.mxu0 0.0
    %397 = vmatpush1.msra.mxu0 %v112
    %398 = vmatprep.subr.mxu0 0.0
    %399 = vmatpush1.msra.mxu0 %v113
    %400 = vmatprep.subr.mxu0 0.0
    %401 = vmatpush1.msra.mxu0 0.0
    %402 = vmatprep.subr.mxu0 0.0
    %403 = vmatpush1.msra.mxu0 0.0
    %404 = vmatprep.subr.mxu0 0.0
    %405 = vmatpush1.msra.mxu0 0.0
    %406 = vmatprep.subr.mxu0 0.0
    %407 = vmatpush1.msra.mxu0 0.0
    %408 = vmatprep.subr.mxu0 0.0
    %409 = vmatpush1.msra.mxu0 0.0
    %410 = vmatprep.subr.mxu0 0.0
    %411 = vmatpush1.msra.mxu0 0.0
    %412 = vmatprep.subr.mxu0 0.0
    %413 = vmatpush1.msra.mxu0 0.0
    %414 = vmatprep.subr.mxu0 0.0
    %415 = vmatpush1.msra.mxu0 0.0
    %416 = vmatprep.subr.mxu0 0.0
    %417 = vmatpush1.msra.mxu0 0.0
    %418 = vmatprep.subr.mxu0 0.0
    %419 = vmatpush1.msra.mxu0 0.0
    %420 = vmatprep.subr.mxu0 0.0
    %421 = vmatpush1.msra.mxu0 0.0
    %422 = vmatprep.subr.mxu0 0.0
    %423 = vmatpush1.msra.mxu0 0.0
    %424 = vmatprep.subr.mxu0 0.0
    %425 = vmatpush1.msra.mxu0 0.0
    %426 = vmatprep.subr.mxu0 0.0
    %427 = vmatpush1.msra.mxu0 0.0
    %428 = vmatprep.subr.mxu0 0.0
    %429 = vmatpush1.msra.mxu0 0.0
    %430 = vmatprep.subr.mxu0 0.0
    %431 = vmatpush1.msra.mxu0 0.0
    %432 = vmatprep.mubr.f32.mxu0 0.0
    %433 = vmatmul.mubr.f32.gmra.mrb[0].mxu0 %v294
    %v434 = vpop.f32.mrb[0].mxu0
    %v435 = vadd.f32 %v365, %v434
    %v436 = vpop.f32.mrb[0].mxu0
    %437 = vdwg.mxu0
    %v438 = vmin.f32 %v147, 0.0
    %v439 = vand.u32 2147483647, %v147
    %v440 = vsub.f32 0.0, %v439
    %v441 = vmul.f32 %v440, 1.442695
    %v442 = vpow.pop %v441
    %v443 = vadd.f32 %v442, 1.0
    %v444 = vlog2.pop %v443
    %v445 = vmul.f32 %v444, 0.6931472
    %v446 = vmul.f32 -0.5, %v442
    %v447 = vadd.f32 %v446, 1.0
    %v448 = vmul.f32 %v447, %v442
    %v449 = vand.u32 2147483647, %v442
    %vm450 = vcmp.lt.f32.partialorder %v449, 0.0004427343
    %v451 = vsel %vm450, %v448, %v445
    %v452 = vsub.f32 %v438, %v451
    %vm453 = vcmask 23552
    %v454 = vsel %vm453, %v452, 0.0
    %455 = vadd.xlane.f32.xlu0 %v454
    %v456 = vpop.xlane.xlu0 %455
    %v457 = vsub.f32 0.0, %v435
    %v458 = vmin.f32 %v457, 0.0
    %v459 = vand.u32 2147483647, %v457
    %v460 = vsub.f32 0.0, %v459
    %v461 = vmul.f32 %v460, 1.442695
    %v462 = vpow.pop %v461
    %v463 = vadd.f32 %v462, 1.0
    %v464 = vlog2.pop %v463
    %v465 = vmul.f32 %v464, 0.6931472
    %v466 = vmul.f32 -0.5, %v462
    %v467 = vadd.f32 %v466, 1.0
    %v468 = vmul.f32 %v467, %v462
    %v469 = vand.u32 2147483647, %v462
    %vm470 = vcmp.lt.f32.partialorder %v469, 0.0004427343
    %v471 = vsel %vm470, %v468, %v465
    %v472 = vsub.f32 %v458, %v471
    %vm473 = vcmask 97280
    %v474 = vsel %vm473, %v472, 0.0
    %475 = vadd.xlane.f32.xlu0 %v474
    %v476 = vpop.xlane.xlu0 %475
    %v477 = vadd.f32 %v456, %v476
    %v478 = vmul.f32 %v477, %v25
    %v479 = vsel %vm140, %v478, 0.0
    %480 = vadd.xlane.f32.xlu0 %v479
    %v481 = vpop.xlane.xlu0 %480
    %v482 = vrot.slane %v481, 4
    %v483 = vadd.f32 %v481, %v482
    %v484 = vrot.slane %v483, 2
    %v485 = vadd.f32 %v483, %v484
    %v486 = vrot.slane %v485, 1
    %v487 = vadd.f32 %v485, %v486
    %s488 = vtos %v487
    %v489 = vlaneseq
    %v490 = vand.u32 %v489, 127
    %vm491 = vcmp.eq.s32.totalorder %v20, 0
    %vm492 = vcmp.eq.s32.totalorder %v490, 0
    %vm493 = vmand %vm491, %vm492
    %v494 = vstv %s488
    %v495 = vsel %vm493, %v494, 0.0
    %496 = vst [vmem:[#allocation2] sm:$0xff] %v495
    // Predicated region
    $region18: #{tpu_custom_call.1} parent=1 // pred_check
      _
    $region19: #{tpu_custom_call.1} parent=1 // pred_check_branch
      %498 = sbr.rel (0) target = $region21
    $region20: #{tpu_custom_call.1} parent=1 // pred_region
      %s500 = ssub.s32 128, 128
      %501 = vsyncadd [#allocation3], %s500
      %s503 = sshll.u32 [#allocation2], 4
      %s504 = int_to_ptr.vmem [resolvable:$true] %s503
      %506 = dma.vmem_to_hbm [thread:$0]  %s504, 128, %s4, [#allocation3]
    $region21: #{tpu_custom_call.1} parent=1 // pred_fallthru
      _
    // Predicated region
    $region22: #{tpu_custom_call.1} parent=1 // pred_check
      _
    $region23: #{tpu_custom_call.1} parent=1 // pred_check_branch
      %508 = sbr.rel (0) target = $region25
    $region24: #{tpu_custom_call.1} parent=1 // pred_region
      %509 = dma.done [#allocation3], 128
    $region25: #{tpu_custom_call.1} parent=1 // pred_fallthru
      _
    %510 = vsyncpa [#allocation3], 1

</llo_original>
